<compile_context>
chip_gen: v5e
topology: v5e:2x2
jax: 0.10.0
libtpu: 0.0.40
codegen_flags: <defaults>
</compile_context>

<pallas_src>
import math

import jax
import jax.numpy as jnp
from jax.experimental import pallas as pl
from jax.experimental.pallas import tpu as pltpu


# ----------------------------- Pallas kernel --------------------------------
def _make_noae_kernel(num_hidden: int):
    def _dense_f32(h, w, b):
        # bf16 x bf16 -> f32 accumulate on the MXU; bias add in f32 on the VPU.
        acc = jnp.dot(h.astype(jnp.bfloat16), w,
                      preferred_element_type=jnp.float32)
        return acc + b

    if num_hidden == 0:
        def kernel(x_ref, w1_ref, b1_ref, wl_ref, bl_ref, o_ref):
            h = jnp.tanh(_dense_f32(x_ref[...], w1_ref[...], b1_ref[...]))
            o_ref[...] = _dense_f32(h, wl_ref[...], bl_ref[...]).astype(o_ref.dtype)
        return kernel

    def kernel(x_ref, w1_ref, b1_ref, wh_ref, bh_ref, wl_ref, bl_ref, o_ref):
        # first layer + tanh (f32)
        h = jnp.tanh(_dense_f32(x_ref[...], w1_ref[...], b1_ref[...]))

        if num_hidden <= 8:
            # shallow: static unroll, LLO scheduler sees the whole chain
            for i in range(num_hidden):
                h = jnp.tanh(_dense_f32(h, wh_ref[i], bh_ref[i]))
        else:
            # deep: keep code size / vreg live ranges bounded
            def body(i, hc):
                return jnp.tanh(_dense_f32(hc, wh_ref[i], bh_ref[i]))
            h = jax.lax.fori_loop(0, num_hidden, body, h)

        # last layer (no activation)
        o_ref[...] = _dense_f32(h, wl_ref[...], bl_ref[...]).astype(o_ref.dtype)

    return kernel


def _round_up(x: int, m: int) -> int:
    return (x + m - 1) // m * m


def noae_forward(x, params, *, block_b: int = 512):
    """Fused NOAE forward pass on TPU.

    x: (B, input_dim) float32
    params: w1 (D,H) bf16, b1 (1,H) f32, wh (L,H,H) bf16, bh (L,1,H) f32,
            wl (H,D) bf16, bl (1,D) f32
    """
    B, D = x.shape
    H = params["w1"].shape[1]
    wh, bh = params["wh"], params["bh"]
    num_hidden = int(wh.shape[0])

    # Batch tile = MXU M dimension: >= 8 (sublane), <= block_b.
    TB = min(block_b, _round_up(B, 8))
    B_pad = _round_up(B, TB)
    if B_pad != B:
        x = jnp.pad(x, ((0, B_pad - B), (0, 0)))
    grid = (pl.cdiv(B_pad, TB),)

    const2 = lambda i: (0, 0)
    const3 = lambda i: (0, 0, 0)

    in_specs = [
        pl.BlockSpec((TB, D), lambda i: (i, 0)),   # x: streamed per batch tile
        pl.BlockSpec((D, H), const2),              # w1: resident
        pl.BlockSpec((1, H), const2),              # b1: resident
    ]
    args = [x, params["w1"], params["b1"]]
    if num_hidden > 0:                             # guard zero-extent blocks
        in_specs += [
            pl.BlockSpec((num_hidden, H, H), const3),   # wh: resident
            pl.BlockSpec((num_hidden, 1, H), const3),   # bh: resident
        ]
        args += [wh, bh]
    in_specs += [
        pl.BlockSpec((H, D), const2),              # wl: resident
        pl.BlockSpec((1, D), const2),              # bl: resident
    ]
    args += [params["wl"], params["bl"]]

    # Advisory cost model for the XLA scheduler.
    flops = 2 * B_pad * (D * H + num_hidden * H * H + H * D)
    transcendentals = B_pad * H * (num_hidden + 1)
    bytes_accessed = (
        int(x.size) * x.dtype.itemsize
        + B_pad * D * 4                                    # output (f32)
        + sum(int(params[k].size) * params[k].dtype.itemsize
              for k in ("w1", "b1", "wl", "bl"))
        + int(wh.size) * wh.dtype.itemsize
        + int(bh.size) * bh.dtype.itemsize
    )

    out = pl.pallas_call(
        _make_noae_kernel(num_hidden),
        out_shape=jax.ShapeDtypeStruct((B_pad, D), jnp.float32),
        grid=grid,
        in_specs=in_specs,
        out_specs=pl.BlockSpec((TB, D), lambda i: (i, 0)),
        compiler_params=pltpu.CompilerParams(
            dimension_semantics=("parallel",)),            # v7x: 2 TCs split the batch
        cost_estimate=pl.CostEstimate(
            flops=flops,
            transcendentals=transcendentals,
            bytes_accessed=bytes_accessed),
    )(*args)

    return out[:B]


# --------------------------- parameter init ----------------------------------
def _xavier_uniform_bf16(key, fan_in, fan_out):
    bound = math.sqrt(6.0 / (fan_in + fan_out))
    # stored (in, out) so the kernel does x @ W; bf16 storage for MXU/HBM.
    w = jax.random.uniform(key, (fan_in, fan_out), jnp.float32, -bound, bound)
    return w.astype(jnp.bfloat16)


def _linear_bias(key, fan_in, fan_out):
    # PyTorch nn.Linear default bias init: U(-1/sqrt(fan_in), 1/sqrt(fan_in))
    bound = 1.0 / math.sqrt(fan_in)
    return jax.random.uniform(key, (1, fan_out), jnp.float32, -bound, bound)


def init_noae_params(key, input_dim, hidden_dim, layers):
    num_hidden = layers - 3
    keys = jax.random.split(key, 2 * (num_hidden + 2))
    ki = iter(keys)

    w1 = _xavier_uniform_bf16(next(ki), input_dim, hidden_dim)
    b1 = _linear_bias(next(ki), input_dim, hidden_dim)

    wh_list, bh_list = [], []
    for _ in range(num_hidden):
        wh_list.append(_xavier_uniform_bf16(next(ki), hidden_dim, hidden_dim))
        bh_list.append(_linear_bias(next(ki), hidden_dim, hidden_dim))
    wh = (jnp.stack(wh_list, axis=0) if num_hidden > 0
          else jnp.zeros((0, hidden_dim, hidden_dim), jnp.bfloat16))
    bh = (jnp.stack(bh_list, axis=0) if num_hidden > 0
          else jnp.zeros((0, 1, hidden_dim), jnp.float32))

    wl = _xavier_uniform_bf16(next(ki), hidden_dim, input_dim)
    bl = _linear_bias(next(ki), hidden_dim, input_dim)

    return {"w1": w1, "b1": b1, "wh": wh, "bh": bh, "wl": wl, "bl": bl}


# ------------------------------ reference ------------------------------------
def noae_reference(x, params):
    def dense(h, w, b):
        return jnp.dot(h.astype(jnp.bfloat16), w,
                       preferred_element_type=jnp.float32) + b

    h = jnp.tanh(dense(x, params["w1"], params["b1"]))
    for i in range(params["wh"].shape[0]):
        h = jnp.tanh(dense(h, params["wh"][i], params["bh"][i]))
    return dense(h, params["wl"], params["bl"])


# --------------------------------- main --------------------------------------
if __name__ == "__main__":
    # NOAE(input_dim=16, hidden_dim=32, layers=5, activation='tanh',
    #      init='xavier')  ->  2 hidden (32x32) layers
    input_dim, hidden_dim, layers = 16, 32, 5
    batch = 64

    key = jax.random.PRNGKey(0)
    k_params, k_x = jax.random.split(key)

    params = init_noae_params(k_params, input_dim, hidden_dim, layers)
    x = jax.random.normal(k_x, (batch, input_dim), jnp.float32)

    # Small TB here so the demo exercises a multi-tile pipelined grid;
    # production batches should use the default block_b=512.
    out = noae_forward(x, params, block_b=16)
    out = jax.block_until_ready(out)

    ref = noae_reference(x, params)
    assert out.shape == (batch, input_dim)
    assert jnp.allclose(out, ref, atol=2e-3, rtol=2e-3), "mismatch vs reference"

    print("KERNEL_OK")
</pallas_src>

<mosaic_0001>
module attributes {stable_mosaic.version = 11 : i64} {
  func.func @kernel(%arg0: i32, %arg1: memref<16x16xf32, #tpu.memory_space<vmem>>, %arg2: memref<16x32xbf16, #tpu.memory_space<vmem>>, %arg3: memref<1x32xf32, #tpu.memory_space<vmem>>, %arg4: memref<2x32x32xbf16, #tpu.memory_space<vmem>>, %arg5: memref<2x1x32xf32, #tpu.memory_space<vmem>>, %arg6: memref<32x16xbf16, #tpu.memory_space<vmem>>, %arg7: memref<1x16xf32, #tpu.memory_space<vmem>>, %arg8: memref<16x16xf32, #tpu.memory_space<vmem>>) attributes {dimension_semantics = [#tpu.dimension_semantics<parallel>], iteration_bounds = array<i64: 4>, scalar_prefetch = 0 : i64, scratch_operands = 0 : i64, tpu.core_type = #tpu.core_type<tc>, window_params = [{transform_indices = @transform_0, window_bounds = array<i64: 16, 16>}, {pipeline_mode = #tpu.pipeline_mode<synchronous>, transform_indices = @transform_1, window_bounds = array<i64: 16, 32>}, {pipeline_mode = #tpu.pipeline_mode<synchronous>, transform_indices = @transform_2, window_bounds = array<i64: 1, 32>}, {pipeline_mode = #tpu.pipeline_mode<synchronous>, transform_indices = @transform_3, window_bounds = array<i64: 2, 32, 32>}, {pipeline_mode = #tpu.pipeline_mode<synchronous>, transform_indices = @transform_4, window_bounds = array<i64: 2, 1, 32>}, {pipeline_mode = #tpu.pipeline_mode<synchronous>, transform_indices = @transform_5, window_bounds = array<i64: 32, 16>}, {pipeline_mode = #tpu.pipeline_mode<synchronous>, transform_indices = @transform_6, window_bounds = array<i64: 1, 16>}, {transform_indices = @transform_7, window_bounds = array<i64: 16, 16>}]} {
    %c0 = arith.constant 0 : index
    %c0_0 = arith.constant 0 : index
    %0 = vector.load %arg1[%c0, %c0_0] : memref<16x16xf32, #tpu.memory_space<vmem>>, vector<16x16xf32>
    %c0_1 = arith.constant 0 : index
    %c0_2 = arith.constant 0 : index
    %1 = vector.load %arg2[%c0_1, %c0_2] : memref<16x32xbf16, #tpu.memory_space<vmem>>, vector<16x32xbf16>
    %c0_3 = arith.constant 0 : index
    %c0_4 = arith.constant 0 : index
    %2 = vector.load %arg3[%c0_3, %c0_4] : memref<1x32xf32, #tpu.memory_space<vmem>>, vector<1x32xf32>
    %3 = arith.truncf %0 : vector<16x16xf32> to vector<16x16xbf16>
    %cst = arith.constant dense<0.000000e+00> : vector<16x32xf32>
    %4 = tpu.matmul %3, %1, %cst {dimension_numbers = #tpu.dot_dimension_numbers<[1], [0], [0], [1], [0, 0, 1, 1], [], []>} : vector<16x16xbf16>, vector<16x32xbf16>, vector<16x32xf32> -> vector<16x32xf32>
    %5 = vector.broadcast %2 : vector<1x32xf32> to vector<16x32xf32>
    %6 = arith.addf %4, %5 : vector<16x32xf32>
    %7 = math.tanh %6 : vector<16x32xf32>
    %c0_5 = arith.constant 0 : index
    %c0_6 = arith.constant 0 : index
    %c0_7 = arith.constant 0 : index
    %8 = vector.load %arg4[%c0_5, %c0_6, %c0_7] : memref<2x32x32xbf16, #tpu.memory_space<vmem>>, vector<1x32x32xbf16>
    %9 = vector.shape_cast %8 : vector<1x32x32xbf16> to vector<32x32xbf16>
    %c0_8 = arith.constant 0 : index
    %c0_9 = arith.constant 0 : index
    %c0_10 = arith.constant 0 : index
    %10 = vector.load %arg5[%c0_8, %c0_9, %c0_10] : memref<2x1x32xf32, #tpu.memory_space<vmem>>, vector<1x1x32xf32>
    %11 = vector.shape_cast %10 : vector<1x1x32xf32> to vector<1x32xf32>
    %12 = arith.truncf %7 : vector<16x32xf32> to vector<16x32xbf16>
    %cst_11 = arith.constant dense<0.000000e+00> : vector<16x32xf32>
    %13 = tpu.matmul %12, %9, %cst_11 {dimension_numbers = #tpu.dot_dimension_numbers<[1], [0], [0], [1], [0, 0, 1, 1], [], []>} : vector<16x32xbf16>, vector<32x32xbf16>, vector<16x32xf32> -> vector<16x32xf32>
    %14 = vector.broadcast %11 : vector<1x32xf32> to vector<16x32xf32>
    %15 = arith.addf %13, %14 : vector<16x32xf32>
    %16 = math.tanh %15 : vector<16x32xf32>
    %c1 = arith.constant 1 : index
    %c0_12 = arith.constant 0 : index
    %c0_13 = arith.constant 0 : index
    %17 = vector.load %arg4[%c1, %c0_12, %c0_13] : memref<2x32x32xbf16, #tpu.memory_space<vmem>>, vector<1x32x32xbf16>
    %18 = vector.shape_cast %17 : vector<1x32x32xbf16> to vector<32x32xbf16>
    %c1_14 = arith.constant 1 : index
    %c0_15 = arith.constant 0 : index
    %c0_16 = arith.constant 0 : index
    %19 = vector.load %arg5[%c1_14, %c0_15, %c0_16] : memref<2x1x32xf32, #tpu.memory_space<vmem>>, vector<1x1x32xf32>
    %20 = vector.shape_cast %19 : vector<1x1x32xf32> to vector<1x32xf32>
    %21 = arith.truncf %16 : vector<16x32xf32> to vector<16x32xbf16>
    %cst_17 = arith.constant dense<0.000000e+00> : vector<16x32xf32>
    %22 = tpu.matmul %21, %18, %cst_17 {dimension_numbers = #tpu.dot_dimension_numbers<[1], [0], [0], [1], [0, 0, 1, 1], [], []>} : vector<16x32xbf16>, vector<32x32xbf16>, vector<16x32xf32> -> vector<16x32xf32>
    %23 = vector.broadcast %20 : vector<1x32xf32> to vector<16x32xf32>
    %24 = arith.addf %22, %23 : vector<16x32xf32>
    %25 = math.tanh %24 : vector<16x32xf32>
    %c0_18 = arith.constant 0 : index
    %c0_19 = arith.constant 0 : index
    %26 = vector.load %arg6[%c0_18, %c0_19] : memref<32x16xbf16, #tpu.memory_space<vmem>>, vector<32x16xbf16>
    %c0_20 = arith.constant 0 : index
    %c0_21 = arith.constant 0 : index
    %27 = vector.load %arg7[%c0_20, %c0_21] : memref<1x16xf32, #tpu.memory_space<vmem>>, vector<1x16xf32>
    %28 = arith.truncf %25 : vector<16x32xf32> to vector<16x32xbf16>
    %cst_22 = arith.constant dense<0.000000e+00> : vector<16x16xf32>
    %29 = tpu.matmul %28, %26, %cst_22 {dimension_numbers = #tpu.dot_dimension_numbers<[1], [0], [0], [1], [0, 0, 1, 1], [], []>} : vector<16x32xbf16>, vector<32x16xbf16>, vector<16x16xf32> -> vector<16x16xf32>
    %30 = vector.broadcast %27 : vector<1x16xf32> to vector<16x16xf32>
    %31 = arith.addf %29, %30 : vector<16x16xf32>
    %c0_23 = arith.constant 0 : index
    %c0_24 = arith.constant 0 : index
    %32 = vector.load %arg8[%c0_23, %c0_24] : memref<16x16xf32, #tpu.memory_space<vmem>>, vector<16x16xf32>
    tpu.vector_store %arg8[%c0_23, %c0_24], %31 {strides = array<i32>} : memref<16x16xf32, #tpu.memory_space<vmem>>, vector<16x16xf32>,
    return
  }
  func.func @transform_0(%arg0: i32) -> (i32, i32) {
    %c0_i32 = arith.constant 0 : i32
    %c0_i32_0 = arith.constant 0 : i32
    return %arg0, %c0_i32 : i32, i32
  }
  func.func @transform_1(%arg0: i32) -> (i32, i32) {
    %c0_i32 = arith.constant 0 : i32
    %c0_i32_0 = arith.constant 0 : i32
    %c0_i32_1 = arith.constant 0 : i32
    return %c0_i32, %c0_i32_0 : i32, i32
  }
  func.func @transform_2(%arg0: i32) -> (i32, i32) {
    %c0_i32 = arith.constant 0 : i32
    %c0_i32_0 = arith.constant 0 : i32
    %c0_i32_1 = arith.constant 0 : i32
    return %c0_i32, %c0_i32_0 : i32, i32
  }
  func.func @transform_3(%arg0: i32) -> (i32, i32, i32) {
    %c0_i32 = arith.constant 0 : i32
    %c0_i32_0 = arith.constant 0 : i32
    %c0_i32_1 = arith.constant 0 : i32
    %c0_i32_2 = arith.constant 0 : i32
    return %c0_i32, %c0_i32_0, %c0_i32_1 : i32, i32, i32
  }
  func.func @transform_4(%arg0: i32) -> (i32, i32, i32) {
    %c0_i32 = arith.constant 0 : i32
    %c0_i32_0 = arith.constant 0 : i32
    %c0_i32_1 = arith.constant 0 : i32
    %c0_i32_2 = arith.constant 0 : i32
    return %c0_i32, %c0_i32_0, %c0_i32_1 : i32, i32, i32
  }
  func.func @transform_5(%arg0: i32) -> (i32, i32) {
    %c0_i32 = arith.constant 0 : i32
    %c0_i32_0 = arith.constant 0 : i32
    %c0_i32_1 = arith.constant 0 : i32
    return %c0_i32, %c0_i32_0 : i32, i32
  }
  func.func @transform_6(%arg0: i32) -> (i32, i32) {
    %c0_i32 = arith.constant 0 : i32
    %c0_i32_0 = arith.constant 0 : i32
    %c0_i32_1 = arith.constant 0 : i32
    return %c0_i32, %c0_i32_0 : i32, i32
  }
  func.func @transform_7(%arg0: i32) -> (i32, i32) {
    %c0_i32 = arith.constant 0 : i32
    %c0_i32_0 = arith.constant 0 : i32
    return %arg0, %c0_i32 : i32, i32
  }
}

</mosaic_0001>

<llo_original>
// kernel: tpu_custom_call.1
$region0: #{tpu_custom_call.1}
  #allocation0 [shape = 'u32[]', space=smem, size = 0x4, offset = 0x4, fixed_abs, tag = 'smem constant byte address 0x4 - core index']
  #allocation1 [shape = 'u32[72,128]{1,0:T(1,128)}', space=vmem, size = 0x9000, scoped, tag = 'internal scratch']
  %s0 = inlined_call_operand.vmem [shape: f32[64,16], index: 0, kind: input, shape index: {}]
  %s1 = inlined_call_operand.vmem [shape: bf16[16,32], index: 1, kind: input, shape index: {}]
  %s2 = inlined_call_operand.vmem [shape: f32[1,32], index: 2, kind: input, shape index: {}]
  %s3 = inlined_call_operand.vmem [shape: bf16[2,32,32], index: 3, kind: input, shape index: {}]
  %s4 = inlined_call_operand.vmem [shape: f32[2,1,32], index: 4, kind: input, shape index: {}]
  %s5 = inlined_call_operand.vmem [shape: bf16[32,16], index: 5, kind: input, shape index: {}]
  %s6 = inlined_call_operand.vmem [shape: f32[1,16], index: 6, kind: input, shape index: {}]
  %s7 = inlined_call_operand.vmem [shape: f32[64,16], index: 7, kind: output, shape index: {}]
  %s8 = sld [smem:[#allocation0]]
  $region61: #{tpu_custom_call.1} parent=0
    _
  %s10 = ssub.s32 1, %s8
  %s11 = scalar_select 0, %s10, %s8
  loop: start=0, step=1, limit=6
  $region2: #{tpu_custom_call.1} parent=0 // loop_pre_header
    _
  $region3: #{tpu_custom_call.1} parent=0 // loop_header
    %s13 = sphi 0, %s17
    %p14 = scmp.ge.s32.totalorder %s13, 6
    %s23 = sphi 0, %s25
    %s26 = sphi 0, %s23
    %s27 = sphi 0, %s26
    %s43 = sphi 0, %s27
    %s47 = sphi 0, %s47
    %s49 = sphi 0, %s47
    %s50 = sphi 0, %s49
    %s64 = sphi 0, %s50
    %s68 = sphi 0, %s68
    %s70 = sphi 0, %s68
    %s71 = sphi 0, %s70
    %s85 = sphi 0, %s71
    %s89 = sphi 0, %s89
    %s91 = sphi 0, %s89
    %s92 = sphi 0, %s91
    %s106 = sphi 0, %s92
    %s110 = sphi 0, %s110
    %s112 = sphi 0, %s110
    %s113 = sphi 0, %s112
    %s127 = sphi 0, %s113
    %s131 = sphi 0, %s131
    %s133 = sphi 0, %s131
    %s134 = sphi 0, %s133
    %s148 = sphi 0, %s134
    %s152 = sphi 0, %s152
    %s154 = sphi 0, %s152
    %s155 = sphi 0, %s154
    %s169 = sphi 0, %s155
    %s175 = sphi 0, %s177
    %s178 = sphi 0, %s175
    %s179 = sphi 0, %s178
    %s195 = sphi 0, %s179
  $region4: #{tpu_custom_call.1} parent=0 // loop_header_branch
    %16 = sbr.rel (%p14) target = $region8
  $region5: #{tpu_custom_call.1} parent=0 // loop_body
    %s18 = ssub.s32 %s13, 1
    %s19 = ssub.s32 %s13, 2
    %s20 = sadd.s32 %s13, 1
    %s21 = ssub.s32 %s13, %s20
    %p22 = scmp.eq.s32.totalorder %s21, 0
    %s24 = sadd.s32 %s23, 1
    %s25 = scalar_select %p22, %s23, %s24
    %p28 = pneg %p22
    %p29 = scmp.eq.s32.totalorder %s13, 3
    %p30 = por %p28, %p29
    %p31 = scmp.ne.s32.totalorder %s23, %s26
    %p32 = scmp.eq.s32.totalorder %s13, 0
    %p33 = por %p31, %p32
    %p34 = scmp.ne.s32.totalorder %s23, %s26
    %p35 = scmp.eq.s32.totalorder %s18, 3
    %p36 = por %p34, %p35
    %p37 = scmp.ne.s32.totalorder %s26, %s27
    %p38 = scmp.eq.s32.totalorder %s18, 0
    %p39 = por %p37, %p38
    %p40 = scmp.ne.s32.totalorder %s26, %s27
    %p41 = scmp.eq.s32.totalorder %s19, 3
    %p42 = por %p40, %p41
    %p44 = scmp.ne.s32.totalorder %s27, %s43
    %p45 = scmp.eq.s32.totalorder %s19, 0
    %p46 = por %p44, %p45
    %s48 = sadd.s32 %s47, 1
    %p51 = scmp.eq.s32.totalorder %s13, 3
    %p52 = scmp.ne.s32.totalorder %s47, %s49
    %p53 = scmp.eq.s32.totalorder %s13, 0
    %p54 = por %p52, %p53
    %p55 = scmp.ne.s32.totalorder %s47, %s49
    %p56 = scmp.eq.s32.totalorder %s18, 3
    %p57 = por %p55, %p56
    %p58 = scmp.ne.s32.totalorder %s49, %s50
    %p59 = scmp.eq.s32.totalorder %s18, 0
    %p60 = por %p58, %p59
    %p61 = scmp.ne.s32.totalorder %s49, %s50
    %p62 = scmp.eq.s32.totalorder %s19, 3
    %p63 = por %p61, %p62
    %p65 = scmp.ne.s32.totalorder %s50, %s64
    %p66 = scmp.eq.s32.totalorder %s19, 0
    %p67 = por %p65, %p66
    %s69 = sadd.s32 %s68, 1
    %p72 = scmp.eq.s32.totalorder %s13, 3
    %p73 = scmp.ne.s32.totalorder %s68, %s70
    %p74 = scmp.eq.s32.totalorder %s13, 0
    %p75 = por %p73, %p74
    %p76 = scmp.ne.s32.totalorder %s68, %s70
    %p77 = scmp.eq.s32.totalorder %s18, 3
    %p78 = por %p76, %p77
    %p79 = scmp.ne.s32.totalorder %s70, %s71
    %p80 = scmp.eq.s32.totalorder %s18, 0
    %p81 = por %p79, %p80
    %p82 = scmp.ne.s32.totalorder %s70, %s71
    %p83 = scmp.eq.s32.totalorder %s19, 3
    %p84 = por %p82, %p83
    %p86 = scmp.ne.s32.totalorder %s71, %s85
    %p87 = scmp.eq.s32.totalorder %s19, 0
    %p88 = por %p86, %p87
    %s90 = sadd.s32 %s89, 1
    %p93 = scmp.eq.s32.totalorder %s13, 3
    %p94 = scmp.ne.s32.totalorder %s89, %s91
    %p95 = scmp.eq.s32.totalorder %s13, 0
    %p96 = por %p94, %p95
    %p97 = scmp.ne.s32.totalorder %s89, %s91
    %p98 = scmp.eq.s32.totalorder %s18, 3
    %p99 = por %p97, %p98
    %p100 = scmp.ne.s32.totalorder %s91, %s92
    %p101 = scmp.eq.s32.totalorder %s18, 0
    %p102 = por %p100, %p101
    %p103 = scmp.ne.s32.totalorder %s91, %s92
    %p104 = scmp.eq.s32.totalorder %s19, 3
    %p105 = por %p103, %p104
    %p107 = scmp.ne.s32.totalorder %s92, %s106
    %p108 = scmp.eq.s32.totalorder %s19, 0
    %p109 = por %p107, %p108
    %s111 = sadd.s32 %s110, 1
    %p114 = scmp.eq.s32.totalorder %s13, 3
    %p115 = scmp.ne.s32.totalorder %s110, %s112
    %p116 = scmp.eq.s32.totalorder %s13, 0
    %p117 = por %p115, %p116
    %p118 = scmp.ne.s32.totalorder %s110, %s112
    %p119 = scmp.eq.s32.totalorder %s18, 3
    %p120 = por %p118, %p119
    %p121 = scmp.ne.s32.totalorder %s112, %s113
    %p122 = scmp.eq.s32.totalorder %s18, 0
    %p123 = por %p121, %p122
    %p124 = scmp.ne.s32.totalorder %s112, %s113
    %p125 = scmp.eq.s32.totalorder %s19, 3
    %p126 = por %p124, %p125
    %p128 = scmp.ne.s32.totalorder %s113, %s127
    %p129 = scmp.eq.s32.totalorder %s19, 0
    %p130 = por %p128, %p129
    %s132 = sadd.s32 %s131, 1
    %p135 = scmp.eq.s32.totalorder %s13, 3
    %p136 = scmp.ne.s32.totalorder %s131, %s133
    %p137 = scmp.eq.s32.totalorder %s13, 0
    %p138 = por %p136, %p137
    %p139 = scmp.ne.s32.totalorder %s131, %s133
    %p140 = scmp.eq.s32.totalorder %s18, 3
    %p141 = por %p139, %p140
    %p142 = scmp.ne.s32.totalorder %s133, %s134
    %p143 = scmp.eq.s32.totalorder %s18, 0
    %p144 = por %p142, %p143
    %p145 = scmp.ne.s32.totalorder %s133, %s134
    %p146 = scmp.eq.s32.totalorder %s19, 3
    %p147 = por %p145, %p146
    %p149 = scmp.ne.s32.totalorder %s134, %s148
    %p150 = scmp.eq.s32.totalorder %s19, 0
    %p151 = por %p149, %p150
    %s153 = sadd.s32 %s152, 1
    %p156 = scmp.eq.s32.totalorder %s13, 3
    %p157 = scmp.ne.s32.totalorder %s152, %s154
    %p158 = scmp.eq.s32.totalorder %s13, 0
    %p159 = por %p157, %p158
    %p160 = scmp.ne.s32.totalorder %s152, %s154
    %p161 = scmp.eq.s32.totalorder %s18, 3
    %p162 = por %p160, %p161
    %p163 = scmp.ne.s32.totalorder %s154, %s155
    %p164 = scmp.eq.s32.totalorder %s18, 0
    %p165 = por %p163, %p164
    %p166 = scmp.ne.s32.totalorder %s154, %s155
    %p167 = scmp.eq.s32.totalorder %s19, 3
    %p168 = por %p166, %p167
    %p170 = scmp.ne.s32.totalorder %s155, %s169
    %p171 = scmp.eq.s32.totalorder %s19, 0
    %p172 = por %p170, %p171
    %s173 = ssub.s32 %s13, %s20
    %p174 = scmp.eq.s32.totalorder %s173, 0
    %s176 = sadd.s32 %s175, 1
    %s177 = scalar_select %p174, %s175, %s176
    %p180 = pneg %p174
    %p181 = scmp.eq.s32.totalorder %s13, 3
    %p182 = por %p180, %p181
    %p183 = scmp.ne.s32.totalorder %s175, %s178
    %p184 = scmp.eq.s32.totalorder %s13, 0
    %p185 = por %p183, %p184
    %p186 = scmp.ne.s32.totalorder %s175, %s178
    %p187 = scmp.eq.s32.totalorder %s18, 3
    %p188 = por %p186, %p187
    %p189 = scmp.ne.s32.totalorder %s178, %s179
    %p190 = scmp.eq.s32.totalorder %s18, 0
    %p191 = por %p189, %p190
    %p192 = scmp.ne.s32.totalorder %s178, %s179
    %p193 = scmp.eq.s32.totalorder %s19, 3
    %p194 = por %p192, %p193
    %p196 = scmp.ne.s32.totalorder %s179, %s195
    %p197 = scmp.eq.s32.totalorder %s19, 0
    %p198 = por %p196, %p197
    %p199 = scmp.le.s32.totalorder 1, %s13
    %p200 = scmp.lt.s32.totalorder %s13, 5
    %p201 = pnand %p199, %p200
    %p202 = pneg %p201
    // Predicated region
    $region9: #{tpu_custom_call.1} parent=5 // pred_check
      _
    $region10: #{tpu_custom_call.1} parent=5 // pred_check_branch
      %204 = sbr.rel (%p201) target = $region12
    $region11: #{tpu_custom_call.1} parent=5 // pred_region
      %s205 = ssub.s32 %s13, 1
      // Predicated region
      $region13: #{tpu_custom_call.1} parent=11 // pred_check
        %p206 = pneg %p60
      $region14: #{tpu_custom_call.1} parent=11 // pred_check_branch
        %208 = sbr.rel (%p206) target = $region16
      $region15: #{tpu_custom_call.1} parent=11 // pred_region
        _
      $region16: #{tpu_custom_call.1} parent=11 // pred_fallthru
        _
      // Predicated region
      $region17: #{tpu_custom_call.1} parent=11 // pred_check
        %p209 = pneg %p81
      $region18: #{tpu_custom_call.1} parent=11 // pred_check_branch
        %211 = sbr.rel (%p209) target = $region20
      $region19: #{tpu_custom_call.1} parent=11 // pred_region
        _
      $region20: #{tpu_custom_call.1} parent=11 // pred_fallthru
        _
      // Predicated region
      $region21: #{tpu_custom_call.1} parent=11 // pred_check
        %p212 = pneg %p102
      $region22: #{tpu_custom_call.1} parent=11 // pred_check_branch
        %214 = sbr.rel (%p212) target = $region24
      $region23: #{tpu_custom_call.1} parent=11 // pred_region
        _
      $region24: #{tpu_custom_call.1} parent=11 // pred_fallthru
        _
      // Predicated region
      $region25: #{tpu_custom_call.1} parent=11 // pred_check
        %p215 = pneg %p123
      $region26: #{tpu_custom_call.1} parent=11 // pred_check_branch
        %217 = sbr.rel (%p215) target = $region28
      $region27: #{tpu_custom_call.1} parent=11 // pred_region
        _
      $region28: #{tpu_custom_call.1} parent=11 // pred_fallthru
        _
      // Predicated region
      $region29: #{tpu_custom_call.1} parent=11 // pred_check
        %p218 = pneg %p144
      $region30: #{tpu_custom_call.1} parent=11 // pred_check_branch
        %220 = sbr.rel (%p218) target = $region32
      $region31: #{tpu_custom_call.1} parent=11 // pred_region
        _
      $region32: #{tpu_custom_call.1} parent=11 // pred_fallthru
        _
      // Predicated region
      $region33: #{tpu_custom_call.1} parent=11 // pred_check
        %p221 = pneg %p165
      $region34: #{tpu_custom_call.1} parent=11 // pred_check_branch
        %223 = sbr.rel (%p221) target = $region36
      $region35: #{tpu_custom_call.1} parent=11 // pred_region
        _
      $region36: #{tpu_custom_call.1} parent=11 // pred_fallthru
        _
    $region12: #{tpu_custom_call.1} parent=5 // pred_fallthru
      _
    %p224 = scmp.lt.s32.totalorder %s13, 4
    // Predicated region
    $region37: #{tpu_custom_call.1} parent=5 // pred_check
      %p225 = pneg %p224
    $region38: #{tpu_custom_call.1} parent=5 // pred_check_branch
      %227 = sbr.rel (%p225) target = $region40
    $region39: #{tpu_custom_call.1} parent=5 // pred_region
      // Predicated region
      $region41: #{tpu_custom_call.1} parent=39 // pred_check
        %p228 = pneg %p33
      $region42: #{tpu_custom_call.1} parent=39 // pred_check_branch
        %230 = sbr.rel (%p228) target = $region44
      $region43: #{tpu_custom_call.1} parent=39 // pred_region
        %s231 = smul.u32 2, %s13
        %p232 = scmp.lt.s32.totalorder %s231, 7
        %s233 = scalar_select %p232, %s231, 7
        %s234 = smul.addr %s233, 8
        %s235 = scalar_lea.vmem %s0, %s234
        %s236 = smul.u32 2, %s13
      $region44: #{tpu_custom_call.1} parent=39 // pred_fallthru
        _
    $region40: #{tpu_custom_call.1} parent=5 // pred_fallthru
      _
    %p237 = scmp.le.s32.totalorder 1, %s13
    %p238 = scmp.lt.s32.totalorder %s13, 5
    %p239 = pnand %p237, %p238
    %p240 = pneg %p239
    // Predicated region
    $region45: #{tpu_custom_call.1} parent=5 // pred_check
      _
    $region46: #{tpu_custom_call.1} parent=5 // pred_check_branch
      %242 = sbr.rel (%p239) target = $region48
    $region47: #{tpu_custom_call.1} parent=5 // pred_region
      %s243 = ssub.s32 %s13, 1
      %s244 = smul.u32 2, %s18
      %p245 = scmp.lt.s32.totalorder %s244, 7
      %s246 = scalar_select %p245, %s244, 7
      %s247 = smul.addr %s246, 8
      %s248 = scalar_lea.vmem %s0, %s247
      %p249 = pneg %p39
      %p250 = pneg %p36
      %p251 = pneg %p60
      %p252 = pneg %p57
      %p253 = pneg %p81
      %p254 = pneg %p78
      %p255 = pneg %p102
      %p256 = pneg %p99
      %p257 = pneg %p123
      %p258 = pneg %p120
      %p259 = pneg %p144
      %p260 = pneg %p141
      %p261 = pneg %p165
      %p262 = pneg %p162
      %p263 = pneg %p191
      %p264 = pneg %p188
      %s265 = smul.u32 2, %s18
      %p266 = scmp.lt.s32.totalorder %s265, 7
      %s267 = scalar_select %p266, %s265, 7
      %s268 = smul.addr %s267, 8
      %s269 = scalar_lea.vmem %s7, %s268
      %s270 = smul.u32 2, %s18
      %p271 = scmp.lt.s32.totalorder %s270, 7
      %s272 = scalar_select %p271, %s270, 7
      %s273 = smul.addr %s272, 8
      %s274 = scalar_lea.vmem %s0, %s273
      %s275 = smul.u32 2, %s18
      %s276 = smul.u32 2, %s18
      %p277 = scmp.lt.s32.totalorder %s276, 7
      %s278 = scalar_select %p277, %s276, 7
      %s279 = smul.addr %s278, 8
      %s280 = scalar_lea.vmem %s7, %s279
      %s281 = smul.u32 2, %s18
      %v283 = vld [vmem:[%s274] sm:$0xff]
      %v284 = vld [vmem:[%s274 + $0x8] sm:$0xff]
      %v285 = vld [vmem:[%s1] sm:$0xf]
      %v286 = vld [vmem:[%s1 + $0x4] sm:$0xf]
      %v287 = vld [vmem:[%s2] sm:$0x1]
      %v288 = vpack.c.bf16 %v284, %v283
      %v290 = vperm.slane %v287, 0
      %v294 = vunpack.c.l.b16 %v285
      %v295 = vunpack.c.l.b16 %v286
      %v296 = vpack.c.b16 %v295, %v294
      %vm298 = vcmask 130048
      %v300 = vsel %vm298, %v288, 0
      %302 = vmatpush.bf16.msra.mxu0 0
      %303 = vmatpush.bf16.msra.mxu0 0
      %304 = vmatpush.bf16.msra.mxu0 0
      %305 = vmatpush.bf16.msra.mxu0 0
      %306 = vmatpush.bf16.msra.mxu0 0
      %307 = vmatpush.bf16.msra.mxu0 0
      %308 = vmatpush.bf16.msra.mxu0 0
      %309 = vmatpush.bf16.msra.mxu0 %v296
      %310 = vmatmul.bf16.gmra.mxu0 %v300
      %v311 = vpop.f32.mrf.mxu0
      %v312 = vadd.f32 %v290, %v311
      %v313 = vpop.f32.mrf.mxu0
      %v314 = vadd.f32 %v290, %v313
      %315 = vdwg.mxu0
      %v316 = vtanh.pop %v312
      %v317 = vtanh.pop %v314
      %v318 = vld [vmem:[%s3] sm:$0xf]
      %v319 = vld [vmem:[%s3 + $0x4] sm:$0xf]
      %v320 = vld [vmem:[%s3 + $0x8] sm:$0xf]
      %v321 = vld [vmem:[%s3 + $0xc] sm:$0xf]
      %v322 = vld [vmem:[%s4] sm:$0x1]
      %v323 = vpack.c.bf16 %v317, %v316
      %v325 = vperm.slane %v322, 0
      %v331 = vunpack.c.l.b16 %v318
      %v332 = vunpack.c.l.b16 %v319
      %v333 = vunpack.c.l.b16 %v320
      %v334 = vunpack.c.l.b16 %v321
      %v335 = vpack.c.b16 %v332, %v331
      %v336 = vpack.c.b16 %v334, %v333
      %vm339 = vcmask 261120
      %v341 = vsel %vm339, %v323, 0
      %343 = vmatpush.bf16.msra.mxu0 0
      %344 = vmatpush.bf16.msra.mxu0 0
      %345 = vmatpush.bf16.msra.mxu0 0
      %346 = vmatpush.bf16.msra.mxu0 0
      %347 = vmatpush.bf16.msra.mxu0 0
      %348 = vmatpush.bf16.msra.mxu0 0
      %349 = vmatpush.bf16.msra.mxu0 %v336
      %350 = vmatpush.bf16.msra.mxu0 %v335
      %351 = vmatmul.bf16.gmra.mxu0 %v341
      %v352 = vpop.f32.mrf.mxu0
      %v353 = vadd.f32 %v325, %v352
      %v354 = vpop.f32.mrf.mxu0
      %v355 = vadd.f32 %v325, %v354
      %356 = vdwg.mxu0
      %v357 = vtanh.pop %v353
      %v358 = vtanh.pop %v355
      %s359 = scalar_lea.vmem %s3, 16
      %v360 = vld [vmem:[%s359] sm:$0xf]
      %v361 = vld [vmem:[%s359 + $0x4] sm:$0xf]
      %v362 = vld [vmem:[%s359 + $0x8] sm:$0xf]
      %v363 = vld [vmem:[%s359 + $0xc] sm:$0xf]
      %s364 = scalar_lea.vmem %s4, 1
      %v365 = vld [vmem:[%s364] sm:$0x1]
      %v366 = vpack.c.bf16 %v358, %v357
      %v368 = vperm.slane %v365, 0
      %v374 = vunpack.c.l.b16 %v360
      %v375 = vunpack.c.l.b16 %v361
      %v376 = vunpack.c.l.b16 %v362
      %v377 = vunpack.c.l.b16 %v363
      %v378 = vpack.c.b16 %v375, %v374
      %v379 = vpack.c.b16 %v377, %v376
      %v383 = vsel %vm339, %v366, 0
      %385 = vmatpush.bf16.msra.mxu0 0
      %386 = vmatpush.bf16.msra.mxu0 0
      %387 = vmatpush.bf16.msra.mxu0 0
      %388 = vmatpush.bf16.msra.mxu0 0
      %389 = vmatpush.bf16.msra.mxu0 0
      %390 = vmatpush.bf16.msra.mxu0 0
      %391 = vmatpush.bf16.msra.mxu0 %v379
      %392 = vmatpush.bf16.msra.mxu0 %v378
      %393 = vmatmul.bf16.gmra.mxu0 %v383
      %v394 = vpop.f32.mrf.mxu0
      %v395 = vadd.f32 %v368, %v394
      %v396 = vpop.f32.mrf.mxu0
      %v397 = vadd.f32 %v368, %v396
      %398 = vdwg.mxu0
      %v399 = vtanh.pop %v395
      %v400 = vtanh.pop %v397
      %v401 = vld [vmem:[%s5] sm:$0xf]
      %v402 = vld [vmem:[%s5 + $0x4] sm:$0xf]
      %v403 = vld [vmem:[%s5 + $0x8] sm:$0xf]
      %v404 = vld [vmem:[%s5 + $0xc] sm:$0xf]
      %v405 = vld [vmem:[%s6] sm:$0x1]
      %v406 = vpack.c.bf16 %v400, %v399
      %v408 = vperm.slane %v405, 0
      %v414 = vunpack.c.l.b16 %v401
      %v415 = vunpack.c.l.b16 %v402
      %v416 = vunpack.c.l.b16 %v403
      %v417 = vunpack.c.l.b16 %v404
      %v418 = vpack.c.b16 %v415, %v414
      %v419 = vpack.c.b16 %v417, %v416
      %v423 = vsel %vm339, %v406, 0
      %425 = vmatpush.bf16.msra.mxu0 0
      %426 = vmatpush.bf16.msra.mxu0 0
      %427 = vmatpush.bf16.msra.mxu0 0
      %428 = vmatpush.bf16.msra.mxu0 0
      %429 = vmatpush.bf16.msra.mxu0 0
      %430 = vmatpush.bf16.msra.mxu0 0
      %431 = vmatpush.bf16.msra.mxu0 %v419
      %432 = vmatpush.bf16.msra.mxu0 %v418
      %433 = vmatmul.bf16.gmra.mxu0 %v423
      %v434 = vpop.f32.mrf.mxu0
      %v435 = vadd.f32 %v408, %v434
      %v436 = vpop.f32.mrf.mxu0
      %v437 = vadd.f32 %v408, %v436
      %438 = vdwg.mxu0
      %439 = vst.msk [vmem:[%s280] sm:$0xff] %vm298, %v435
      %440 = vst.msk [vmem:[%s280 + $0x8] sm:$0xff] %vm298, %v437
      %s441 = smul.u32 2, %s18
      %p442 = scmp.lt.s32.totalorder %s441, 7
      %s443 = scalar_select %p442, %s441, 7
      %s444 = smul.addr %s443, 8
      %s445 = scalar_lea.vmem %s7, %s444
      // Predicated region
      $region49: #{tpu_custom_call.1} parent=47 // pred_check
        %p446 = pneg %p188
      $region50: #{tpu_custom_call.1} parent=47 // pred_check_branch
        %448 = sbr.rel (%p446) target = $region52
      $region51: #{tpu_custom_call.1} parent=47 // pred_region
        %s449 = smul.u32 2, %s18
      $region52: #{tpu_custom_call.1} parent=47 // pred_fallthru
        _
    $region48: #{tpu_custom_call.1} parent=5 // pred_fallthru
      _
    %p450 = scmp.le.s32.totalorder 2, %s13
    // Predicated region
    $region53: #{tpu_custom_call.1} parent=5 // pred_check
      %p451 = pneg %p450
    $region54: #{tpu_custom_call.1} parent=5 // pred_check_branch
      %453 = sbr.rel (%p451) target = $region56
    $region55: #{tpu_custom_call.1} parent=5 // pred_region
      %s454 = ssub.s32 %s13, 2
      // Predicated region
      $region57: #{tpu_custom_call.1} parent=55 // pred_check
        %p455 = pneg %p194
      $region58: #{tpu_custom_call.1} parent=55 // pred_check_branch
        %457 = sbr.rel (%p455) target = $region60
      $region59: #{tpu_custom_call.1} parent=55 // pred_region
        %s458 = smul.u32 2, %s19
        %p459 = scmp.lt.s32.totalorder %s458, 7
        %s460 = scalar_select %p459, %s458, 7
        %s461 = smul.addr %s460, 8
        %s462 = scalar_lea.vmem %s7, %s461
      $region60: #{tpu_custom_call.1} parent=55 // pred_fallthru
        _
    $region56: #{tpu_custom_call.1} parent=5 // pred_fallthru
      _
  $region6: #{tpu_custom_call.1} parent=0 // loop_footer
    %s17 = sadd.s32 1, %s13
  $region7: #{tpu_custom_call.1} parent=0 // loop_footer_branch
    %12 = sbr.rel target = $region3
  $region8: #{tpu_custom_call.1} parent=0 // loop_exit
    _

</llo_original>
